<compile_context>
chip_gen: v7x
topology: tpu7x:2x2x1
jax: 0.10.0
libtpu: 0.0.40
codegen_flags: <defaults>
</compile_context>

<pallas_src>
import jax
import jax.numpy as jnp
from jax.experimental import pallas as pl
from jax.experimental.pallas import tpu as pltpu


def _round_up(x, m):
    return ((x + m - 1) // m) * m


def _eiie_output_kernel(x_ref, w_ref, b_ref, o_ref):
    # x_ref: (TB, C*W) VMEM block — h=0 activation rows, lane-dense contraction axis.
    # w_ref: (1, C*W)  VMEM conv weight, lane-dense.
    # b_ref: (1,)      SMEM scalar bias.
    # o_ref: (TB, 2)   VMEM output block.
    x = x_ref[...].astype(jnp.float32)                 # (TB, CW)
    w = w_ref[...].astype(jnp.float32)                 # (1, CW)

    # VPU multiply (weight broadcast over batch) + one lane reduce over C*W.
    logit = jnp.sum(x * w, axis=-1, keepdims=True)     # (TB, 1)
    logit = logit + b_ref[0]                           # scalar bias from SMEM

    # Numerically stable softmax over [1.0 (btc bias), logit]; exact division
    # (the approx reciprocal costs ~1e-3 accuracy and buys nothing at this roofline).
    one = jnp.ones_like(logit)
    m = jnp.maximum(one, logit)
    e0 = jnp.exp(one - m)
    e1 = jnp.exp(logit - m)
    denom = e0 + e1
    p0 = e0 / denom                                    # (TB, 1)
    p1 = e1 / denom                                    # (TB, 1)

    # Single fused (TB, 2) store: pick column 0/1 with an iota mask.
    col = jax.lax.broadcasted_iota(jnp.int32, o_ref.shape, 1)
    o_ref[...] = jnp.where(col == 0, p0, p1)


def eiie_output_module(x, conv_weight, conv_bias, *, block_b=512):
    """Forward of EIIE_OutputModule.

    Args:
      x:           (B, C, H, W) NCHW activation.
      conv_weight: (1, C, 1, W) Conv2d(C -> 1, kernel_size=(1, W)) weight.
      conv_bias:   (1,) bias.
    Returns:
      (B, 2) float32: softmax([1.0, conv(x)[:, 0, 0, 0]]) per batch row.
    """
    B, C, H, W = x.shape
    CW = C * W

    # Only the h=0 asset row feeds the output: slice + flatten in the wrapper so the
    # kernel never DMAs the other H-1 rows; allow_input_fusion below lets XLA fuse
    # this into the pallas_call input DMA.  Contraction axis becomes lane-dense.
    x0 = x[:, :, 0, :].reshape(B, CW)                  # (B, C*W)
    w2d = conv_weight.reshape(1, CW)                   # (1, C*W)
    b1d = conv_bias.reshape(1).astype(jnp.float32)     # (1,) scalar path

    # Batch tile: full B when tiny (block == full dim is always legal); otherwise an
    # 8-aligned tile sized for >=2 grid steps so ("parallel",) shards across the two
    # v7x TensorCores while staying large enough to amortize per-step overhead.
    if B <= 8:
        tb = B
    else:
        tb = min(block_b, _round_up(pl.cdiv(B, 2), 8))
    grid = (pl.cdiv(B, tb),)

    itemsize = jnp.dtype(x.dtype).itemsize
    cost = pl.CostEstimate(
        flops=2 * B * CW,
        transcendentals=2 * B,
        bytes_accessed=B * CW * itemsize + CW * itemsize + B * 2 * 4,
    )

    return pl.pallas_call(
        _eiie_output_kernel,
        out_shape=jax.ShapeDtypeStruct((B, 2), jnp.float32),
        grid=grid,
        in_specs=[
            # Lane-dense activation: tile batch only; C*W is full extent (legal).
            pl.BlockSpec((tb, CW), lambda i: (i, 0)),
            # Lane-dense (1, C*W) weight, same (full) block every grid step.
            pl.BlockSpec((1, CW), lambda i: (0, 0)),
            # Scalar bias on the SMEM / scalar path (no padded VMEM tile).
            pl.BlockSpec(memory_space=pltpu.MemorySpace.SMEM),
        ],
        out_specs=pl.BlockSpec((tb, 2), lambda i: (i, 0)),
        compiler_params=pltpu.CompilerParams(
            dimension_semantics=("parallel",),
            allow_input_fusion=[True, False, False],
        ),
        cost_estimate=cost,
    )(x0, w2d, b1d)


def _reference(x, conv_weight, conv_bias):
    # Pure-JAX reference of the PyTorch forward.
    B = x.shape[0]
    logit = jnp.einsum(
        "bcw,cw->b",
        x[:, :, 0, :].astype(jnp.float32),
        conv_weight[0, :, 0, :].astype(jnp.float32)) + conv_bias[0]
    cat = jnp.stack([jnp.ones((B,), jnp.float32), logit], axis=1)
    return jax.nn.softmax(cat, axis=1)


if __name__ == "__main__":
    key = jax.random.PRNGKey(0)

    # Small case: NCHW = (batch, features, assets, window), consistent with the module.
    B, C, H, W = 2, 4, 3, 8
    kx, kw, kb, key = jax.random.split(key, 4)
    x = jax.random.normal(kx, (B, C, H, W), dtype=jnp.float32)
    conv_weight = jax.random.normal(kw, (1, C, 1, W), dtype=jnp.float32) * 0.1
    conv_bias = jax.random.normal(kb, (1,), dtype=jnp.float32) * 0.1

    out = jax.block_until_ready(eiie_output_module(x, conv_weight, conv_bias))
    ref = _reference(x, conv_weight, conv_bias)
    assert out.shape == (B, 2)
    assert jnp.allclose(out, ref, atol=1e-5, rtol=1e-5), (out, ref)

    # Larger case exercising the multi-step tiled grid (2 steps, partial tail block).
    B2, C2, H2, W2 = 20, 8, 4, 16
    kx2, kw2, kb2, key = jax.random.split(key, 4)
    x2 = jax.random.normal(kx2, (B2, C2, H2, W2), dtype=jnp.float32)
    w2 = jax.random.normal(kw2, (1, C2, 1, W2), dtype=jnp.float32) * 0.1
    b2 = jax.random.normal(kb2, (1,), dtype=jnp.float32) * 0.1

    out2 = jax.block_until_ready(eiie_output_module(x2, w2, b2))
    ref2 = _reference(x2, w2, b2)
    assert out2.shape == (B2, 2)
    assert jnp.allclose(out2, ref2, atol=1e-5, rtol=1e-5), (out2, ref2)

    print("KERNEL_OK")
</pallas_src>

<mosaic_0001>
module attributes {stable_mosaic.version = 11 : i64} {
  func.func @_eiie_output_kernel(%arg0: i32, %arg1: memref<2x32xf32, #tpu.memory_space<vmem>>, %arg2: memref<1x32xf32, #tpu.memory_space<vmem>>, %arg3: memref<1xf32, #tpu.memory_space<smem>>, %arg4: memref<2x2xf32, #tpu.memory_space<vmem>>) attributes {dimension_semantics = [#tpu.dimension_semantics<parallel>], iteration_bounds = array<i64: 1>, scalar_prefetch = 0 : i64, scratch_operands = 0 : i64, tpu.core_type = #tpu.core_type<tc>, window_params = [{transform_indices = @transform_0, window_bounds = array<i64: 2, 32>}, {pipeline_mode = #tpu.pipeline_mode<synchronous>, transform_indices = @transform_1, window_bounds = array<i64: 1, 32>}, {transform_indices = @transform_2, window_bounds = array<i64: 1>}, {transform_indices = @transform_3, window_bounds = array<i64: 2, 2>}]} {
    %c0 = arith.constant 0 : index
    %c0_0 = arith.constant 0 : index
    %0 = vector.load %arg1[%c0, %c0_0] : memref<2x32xf32, #tpu.memory_space<vmem>>, vector<2x32xf32>
    %c0_1 = arith.constant 0 : index
    %c0_2 = arith.constant 0 : index
    %1 = vector.load %arg2[%c0_1, %c0_2] : memref<1x32xf32, #tpu.memory_space<vmem>>, vector<1x32xf32>
    %2 = vector.broadcast %1 : vector<1x32xf32> to vector<2x32xf32>
    %3 = arith.mulf %0, %2 : vector<2x32xf32>
    %cst = arith.constant dense<0.000000e+00> : vector<2xf32>
    %4 = vector.multi_reduction <add>, %3, %cst [1] : vector<2x32xf32> to vector<2xf32>
    %5 = vector.shape_cast %4 : vector<2xf32> to vector<2x1xf32>
    %c0_3 = arith.constant 0 : index
    %6 = memref.load %arg3[%c0_3] : memref<1xf32, #tpu.memory_space<smem>>
    %7 = vector.broadcast %6 : f32 to vector<2x1xf32>
    %8 = arith.addf %5, %7 : vector<2x1xf32>
    %cst_4 = arith.constant 1.000000e+00 : f32
    %9 = vector.broadcast %cst_4 : f32 to vector<2x1xf32>
    %10 = arith.maximumf %9, %8 : vector<2x1xf32>
    %11 = arith.subf %9, %10 : vector<2x1xf32>
    %12 = math.exp %11 : vector<2x1xf32>
    %13 = arith.subf %8, %10 : vector<2x1xf32>
    %14 = math.exp %13 : vector<2x1xf32>
    %15 = arith.addf %12, %14 : vector<2x1xf32>
    %16 = arith.divf %12, %15 : vector<2x1xf32>
    %17 = arith.divf %14, %15 : vector<2x1xf32>
    %18 = tpu.iota {dimensions = array<i32: 1>} : vector<2x2xi32>
    %c0_i32 = arith.constant 0 : i32
    %19 = vector.broadcast %c0_i32 : i32 to vector<2x2xi32>
    %20 = arith.cmpi eq, %18, %19 : vector<2x2xi32>
    %21 = vector.shape_cast %16 : vector<2x1xf32> to vector<2x1xf32>
    %22 = vector.broadcast %21 : vector<2x1xf32> to vector<2x2xf32>
    %23 = vector.shape_cast %17 : vector<2x1xf32> to vector<2x1xf32>
    %24 = vector.broadcast %23 : vector<2x1xf32> to vector<2x2xf32>
    %25 = arith.select %20, %22, %24 : vector<2x2xi1>, vector<2x2xf32>
    %c0_5 = arith.constant 0 : index
    %c0_6 = arith.constant 0 : index
    %26 = vector.load %arg4[%c0_5, %c0_6] : memref<2x2xf32, #tpu.memory_space<vmem>>, vector<2x2xf32>
    tpu.vector_store %arg4[%c0_5, %c0_6], %25 {strides = array<i32>} : memref<2x2xf32, #tpu.memory_space<vmem>>, vector<2x2xf32>,
    return
  }
  func.func @transform_0(%arg0: i32) -> (i32, i32) {
    %c0_i32 = arith.constant 0 : i32
    %c0_i32_0 = arith.constant 0 : i32
    return %arg0, %c0_i32 : i32, i32
  }
  func.func @transform_1(%arg0: i32) -> (i32, i32) {
    %c0_i32 = arith.constant 0 : i32
    %c0_i32_0 = arith.constant 0 : i32
    %c0_i32_1 = arith.constant 0 : i32
    return %c0_i32, %c0_i32_0 : i32, i32
  }
  func.func @transform_2(%arg0: i32) -> i32 {
    %c0_i32 = arith.constant 0 : i32
    %c0_i32_0 = arith.constant 0 : i32
    return %c0_i32 : i32
  }
  func.func @transform_3(%arg0: i32) -> (i32, i32) {
    %c0_i32 = arith.constant 0 : i32
    %c0_i32_0 = arith.constant 0 : i32
    return %arg0, %c0_i32 : i32, i32
  }
}

</mosaic_0001>

<llo_original>
// kernel: tpu_custom_call.1
$region0: #{tpu_custom_call.1}
  #allocation0 [shape = 'u32[]', space=smem, size = 0x4, offset = 0x4, fixed_abs, tag = 'smem constant byte address 0x4 - core index']
  #allocation1 [shape = 'u32[144,128]{1,0:T(1,128)}', space=vmem, size = 0x12000, scoped, tag = 'internal scratch']
  #allocation2 [shape = 'f32[1]{0:T(128)S(6)}', space=smem, size = 0x200, scoped, tag = 'scoped memory for tpu_custom_call.1']
  %s0 = inlined_call_operand.vmem [shape: f32[2,32], index: 0, kind: input, shape index: {}]
  %s1 = inlined_call_operand.vmem [shape: f32[1,32], index: 1, kind: input, shape index: {}]
  %s2 = inlined_call_operand.<no memory space> [shape: f32[1], index: 2, kind: input, shape index: {}]
  %s3 = inlined_call_operand.hbm [shape: f32[2,2], index: 3, kind: output, shape index: {}]
  %s4 = sld [smem:[#allocation0]]
  $region22: #{tpu_custom_call.1} parent=0
    _
  %s6 = ssub.s32 1, %s4
  %s7 = scalar_select 0, %s6, %s4
  %8 = sst [smem:[#allocation2]] %s2
  $region1: #{tpu_custom_call.1} parent=0
    #allocation3 [shape = 'u8[1024]{0}', space=vmem, size = 0x400, scoped, tag = 'output window, operand 0, single buffered']
    #allocation4 [shape = 's32[1]{0}', space=sflag, size = 0x4, scoped, tag = 'scoped memory for tpu_custom_call.1']
    %9 = vsyncpa [#allocation4], 0
    // Predicated region
    $region2: #{tpu_custom_call.1} parent=1 // pred_check
      _
    $region3: #{tpu_custom_call.1} parent=1 // pred_check_branch
      %11 = sbr.rel (0) target = $region5
    $region4: #{tpu_custom_call.1} parent=1 // pred_region
      _
    $region5: #{tpu_custom_call.1} parent=1 // pred_fallthru
      _
    // Predicated region
    $region6: #{tpu_custom_call.1} parent=1 // pred_check
      _
    $region7: #{tpu_custom_call.1} parent=1 // pred_check_branch
      %13 = sbr.rel (0) target = $region9
    $region8: #{tpu_custom_call.1} parent=1 // pred_region
      _
    $region9: #{tpu_custom_call.1} parent=1 // pred_fallthru
      _
    // Predicated region
    $region10: #{tpu_custom_call.1} parent=1 // pred_check
      _
    $region11: #{tpu_custom_call.1} parent=1 // pred_check_branch
      %15 = sbr.rel (0) target = $region13
    $region12: #{tpu_custom_call.1} parent=1 // pred_region
      _
    $region13: #{tpu_custom_call.1} parent=1 // pred_fallthru
      _
    %v16 = vld [vmem:[%s0] sm:$0x3]
    %v17 = vld [vmem:[%s1] sm:$0x1]
    %v19 = vlaneseq
    %v20 = vshrl.u32 %v19, 7
    %v21 = vsub.s32 0, %v20
    %v22 = vrot.slane %v17, %v21
    %v24 = vmul.f32 %v16, %v22
    %vm25 = vcmask 254976
    %v26 = vsel %vm25, %v24, 0.0
    %27 = vadd.xlane.f32.xlu0 %v26
    %v28 = vpop.xlane.xlu0 %27
    %s29 = sld [smem:[#allocation2]]
    %v30 = vstv %s29
    %v31 = vadd.f32 %v28, %v30
    %v32 = vmax.f32 %v31, 1.0
    %v33 = vsub.f32 1.0, %v32
    %v34 = vmul.f32 %v33, 1.442695
    %v35 = vpow.pop %v34
    %v36 = vsub.f32 %v31, %v32
    %v37 = vmul.f32 %v36, 1.442695
    %v38 = vpow.pop %v37
    %v39 = vadd.f32 %v35, %v38
    %v40 = vrcp.pop %v39
    %v41 = vmul.f32 %v35, %v40
    %v42 = vmul.f32 %v38, %v40
    %v43 = vlaneseq
    %v44 = vand.u32 %v43, 127
    %vm45 = vcmp.eq.s32.totalorder %v44, 0
    %v46 = vsel %vm45, %v41, %v42
    %vm47 = vcmask 9216
    %48 = vst.msk [vmem:[#allocation3] sm:$0x3] %vm47, %v46
    // Predicated region
    $region14: #{tpu_custom_call.1} parent=1 // pred_check
      _
    $region15: #{tpu_custom_call.1} parent=1 // pred_check_branch
      %50 = sbr.rel (0) target = $region17
    $region16: #{tpu_custom_call.1} parent=1 // pred_region
      %s52 = ssub.s32 32, 32
      %53 = vsyncadd [#allocation4], %s52
      %s55 = sshll.u32 [#allocation3], 4
      %s56 = int_to_ptr.vmem [resolvable:$true] %s55
      %58 = dma.vmem_to_hbm [thread:$0]  %s56, 32, %s3, [#allocation4]
    $region17: #{tpu_custom_call.1} parent=1 // pred_fallthru
      _
    // Predicated region
    $region18: #{tpu_custom_call.1} parent=1 // pred_check
      _
    $region19: #{tpu_custom_call.1} parent=1 // pred_check_branch
      %60 = sbr.rel (0) target = $region21
    $region20: #{tpu_custom_call.1} parent=1 // pred_region
      %61 = dma.done [#allocation4], 32
    $region21: #{tpu_custom_call.1} parent=1 // pred_fallthru
      _
    %62 = vsyncpa [#allocation4], 1

</llo_original>
